<compile_context>
chip_gen: v6e
topology: v6e:2x2x1
jax: 0.10.0
libtpu: 0.0.40
codegen_flags: <defaults>
</compile_context>

<pallas_src>
import functools

import jax
import jax.numpy as jnp
from jax.experimental import pallas as pl
from jax.experimental.pallas import tpu as pltpu


def _vmem_limit_bytes():
    """~70% of this generation's physical VMEM (v5e/v6e: 128 MiB -> ~90 MiB,
    v7x: 64 MiB -> ~45 MiB).  Used both as the compiler's scoped-VMEM limit and
    as the tile-picker budget."""
    try:
        cap = pltpu.get_tpu_info().vmem_capacity_bytes
    except Exception:  # conservative fallback (e.g. emulated runs)
        cap = 64 * 1024 * 1024
    return int(cap * 0.70)


def _pick_tiles(B, Lq, Lk, D, Do, *, cd_size, out_size, attw_size, budget):
    """Choose (block_b, block_lq).

    Prefers the biggest folded tile that fits the (double-buffered) VMEM budget
    -- big tiles amortize the ~0.35 us/step grid overhead and fill MXU rows for
    the flattened weight matmuls (block_b*block_lq rows) -- while keeping at
    least 2 grid steps so megacore sharding (v7x) and DMA/compute pipelining
    stay alive."""
    sublane = 8 if cd_size >= 4 else 16
    # Lq tile candidates: full Lq, then divisors that are sublane multiples
    # (keeps the in-kernel (Bt, Lq, D) -> (Bt*Lq, D) reshapes layout no-ops).
    lq_cands = [Lq]
    for d in range(Lq - sublane, 0, -sublane):
        if Lq % d == 0:
            lq_cands.append(d)
    b_divs = [d for d in range(B, 0, -1) if B % d == 0]
    weights_bytes = (D * D + 2 * D * Do) * cd_size

    def vmem_ok(bb, lq):
        tiles = (bb * (lq * D + Lk * D) * cd_size
                 + bb * lq * Do * out_size
                 + bb * lq * Lk * attw_size)
        inter = bb * lq * (2 * Lk + 2 * D + Do) * 4  # f32 intermediates
        return 2 * (tiles + weights_bytes) + inter <= budget

    can_split = (B > 1) or (len(lq_cands) > 1)
    for lq in lq_cands:
        n_lq = Lq // lq
        for bb in b_divs:
            n_steps = (B // bb) * n_lq
            if n_steps < 2 and can_split:
                continue  # never collapse the grid to one step if avoidable
            if vmem_ok(bb, lq):
                return bb, lq
    return 1, lq_cands[-1]  # nothing fits: fall back to the smallest tile


def _attention_kernel(q_ref, c_ref, w_in_ref, w_out_ref, out_ref, *attw_ref,
                      approx_reciprocal):
    Bt, Lqb, D = q_ref.shape
    Do = out_ref.shape[2]

    q = q_ref[...]                       # (Bt, Lqb, D)  compute dtype
    c = c_ref[...]                       # (Bt, Lk,  D)
    cd = q.dtype

    # Query projection ('general' attention).  W_in is batch independent, so
    # the folded batch is flattened to fill MXU rows (layout no-op when Lqb is
    # a sublane multiple; the tile picker prefers such shapes).
    qg_flat = jnp.dot(q.reshape(Bt * Lqb, D), w_in_ref[...],
                      preferred_element_type=jnp.float32)        # (Bt*Lqb, D) f32
    qg = qg_flat.reshape(Bt, Lqb, D)

    # Scores: contract the feature dims directly -- no XLU transpose of context.
    scores = jax.lax.dot_general(
        qg.astype(cd), c,
        dimension_numbers=(((2,), (2,)), ((0,), (0,))),
        preferred_element_type=jnp.float32)                      # (Bt, Lqb, Lk) f32

    # Numerically stable softmax, all in f32 (VPU/EUP).
    m = jnp.max(scores, axis=-1, keepdims=True)
    e = jnp.exp(scores - m)
    denom = jnp.sum(e, axis=-1, keepdims=True)
    if approx_reciprocal:
        w = e * pl.reciprocal(denom, approx=True)  # EUP vrcp, ~free, ~1e-4 rel
    else:
        w = e / denom                              # exact normalization (default)

    # mix = weights @ context (batched).
    mix = jax.lax.dot_general(
        w.astype(cd), c,
        dimension_numbers=(((2,), (1,)), ((0,), (0,))),
        preferred_element_type=jnp.float32)                      # (Bt, Lqb, D) f32

    # Output projection: torch.cat((mix, q'), -1) @ W_out^T realized as two
    # accumulating matmuls against static row-slices of W_out (no concatenate).
    out = jnp.dot(mix.reshape(Bt * Lqb, D).astype(cd),
                  w_out_ref[pl.ds(0, D), :],
                  preferred_element_type=jnp.float32)
    out = out + jnp.dot(qg_flat.astype(cd),
                        w_out_ref[pl.ds(D, D), :],
                        preferred_element_type=jnp.float32)
    out = jnp.tanh(out)                                          # (Bt*Lqb, Do) f32

    out_ref[...] = out.reshape(Bt, Lqb, Do).astype(out_ref.dtype)
    if attw_ref:
        attw_ref[0][...] = w.astype(attw_ref[0].dtype)


@functools.partial(
    jax.jit,
    static_argnames=("compute_dtype", "return_weights", "weights_dtype",
                     "block_b", "block_lq", "approx_reciprocal"))
def attention_pallas(query, context, w_in, w_out, *,
                     compute_dtype=jnp.bfloat16, return_weights=True,
                     weights_dtype=None, block_b=None, block_lq=None,
                     approx_reciprocal=False):
    """query: (B, Lq, D), context: (B, Lk, D),
    w_in: (D, D) = linear_in.weight.T, w_out: (2D, Do) = linear_out.weight.T.

    MXU operands are cast to `compute_dtype` (default bf16) with f32
    accumulation; softmax / tanh are computed in f32.  Returns (out, weights)
    or just `out` when return_weights=False (drops the largest HBM writeback).
    """
    B, Lq, D = query.shape
    Lk = context.shape[1]
    Do = w_out.shape[1]
    assert w_in.shape == (D, D)
    assert w_out.shape == (2 * D, Do)

    cd = jnp.dtype(compute_dtype) if compute_dtype is not None else jnp.dtype(query.dtype)
    out_dtype = jnp.dtype(query.dtype)
    attw_dtype = jnp.dtype(weights_dtype) if weights_dtype is not None else out_dtype

    q_c, c_c = query.astype(cd), context.astype(cd)
    w_in_c, w_out_c = w_in.astype(cd), w_out.astype(cd)

    vmem_limit = _vmem_limit_bytes()
    if block_b is None or block_lq is None:
        bb, lqb = _pick_tiles(
            B, Lq, Lk, D, Do,
            cd_size=cd.itemsize,
            out_size=out_dtype.itemsize,
            attw_size=(attw_dtype.itemsize if return_weights else 0),
            budget=int(vmem_limit * 0.8))  # headroom for compiler temporaries
        block_b = block_b if block_b is not None else bb
        block_lq = block_lq if block_lq is not None else lqb
    assert B % block_b == 0 and Lq % block_lq == 0
    grid = (B // block_b, Lq // block_lq)   # lq innermost: context stays resident

    flops = 2 * B * Lq * (D * D + 2 * Lk * D + 2 * D * Do)
    transcendentals = B * Lq * (Lk + Do + 1)
    bytes_accessed = (cd.itemsize * (B * Lq * D + B * Lk * D + D * D + 2 * D * Do)
                      + out_dtype.itemsize * B * Lq * Do
                      + (attw_dtype.itemsize * B * Lq * Lk if return_weights else 0))

    in_specs = [
        pl.BlockSpec((block_b, block_lq, D), lambda b, l: (b, l, 0)),
        pl.BlockSpec((block_b, Lk, D), lambda b, l: (b, 0, 0)),
        # Weights: constant index map -> fetched once, never re-fetched.
        pl.BlockSpec((D, D), lambda b, l: (0, 0)),
        pl.BlockSpec((2 * D, Do), lambda b, l: (0, 0)),
    ]
    out_shape = [jax.ShapeDtypeStruct((B, Lq, Do), out_dtype)]
    out_specs = [pl.BlockSpec((block_b, block_lq, Do), lambda b, l: (b, l, 0))]
    if return_weights:
        out_shape.append(jax.ShapeDtypeStruct((B, Lq, Lk), attw_dtype))
        out_specs.append(pl.BlockSpec((block_b, block_lq, Lk), lambda b, l: (b, l, 0)))

    results = pl.pallas_call(
        functools.partial(_attention_kernel, approx_reciprocal=approx_reciprocal),
        out_shape=tuple(out_shape),
        grid=grid,
        in_specs=in_specs,
        out_specs=tuple(out_specs),
        compiler_params=pltpu.CompilerParams(
            dimension_semantics=("parallel", "parallel"),
            vmem_limit_bytes=vmem_limit),
        cost_estimate=pl.CostEstimate(
            flops=flops,
            transcendentals=transcendentals,
            bytes_accessed=bytes_accessed),
    )(q_c, c_c, w_in_c, w_out_c)

    if return_weights:
        out, attw = results
        return out, attw
    return results[0]


def attention_reference(query, context, w_in, w_out, compute_dtype=None):
    """Pure-JAX mirror of the PyTorch module.  If `compute_dtype` is given, the
    matmul operands are cast to it (with f32 accumulation) at the same points
    as the kernel, so the comparison is apples-to-apples in precision."""
    cd = jnp.dtype(compute_dtype) if compute_dtype is not None else jnp.dtype(query.dtype)
    q = query.astype(cd)
    c = context.astype(cd)
    qg = jnp.einsum("bld,de->ble", q, w_in.astype(cd),
                    preferred_element_type=jnp.float32)
    scores = jnp.einsum("bld,bkd->blk", qg.astype(cd), c,
                        preferred_element_type=jnp.float32)
    weights = jax.nn.softmax(scores, axis=-1)
    mix = jnp.einsum("blk,bkd->bld", weights.astype(cd), c,
                     preferred_element_type=jnp.float32)
    combined = jnp.concatenate([mix, qg], axis=-1).astype(cd)
    out = jnp.tanh(jnp.einsum("blc,co->blo", combined, w_out.astype(cd),
                              preferred_element_type=jnp.float32))
    return out.astype(query.dtype), weights.astype(query.dtype)


if __name__ == "__main__":
    B, Lq, Lk, D, Do = 2, 8, 8, 32, 32

    key = jax.random.PRNGKey(0)
    kq, kc, kw1, kw2 = jax.random.split(key, 4)

    query = jax.random.normal(kq, (B, Lq, D), dtype=jnp.float32)
    context = jax.random.normal(kc, (B, Lk, D), dtype=jnp.float32)

    # nn.Linear-style init (bias=False), pre-transposed:
    #   linear_in.weight  (D, D)    -> w_in  (D, D)
    #   linear_out.weight (Do, 2D)  -> w_out (2D, Do)
    bound_in = 1.0 / (D ** 0.5)
    bound_out = 1.0 / ((2 * D) ** 0.5)
    w_in = jax.random.uniform(kw1, (D, D), jnp.float32, -bound_in, bound_in)
    w_out = jax.random.uniform(kw2, (2 * D, Do), jnp.float32, -bound_out, bound_out)

    out, attw = attention_pallas(query, context, w_in, w_out)
    out = jax.block_until_ready(out)
    attw = jax.block_until_ready(attw)

    # Precision-matched reference (bf16 MXU operands, f32 accumulation).  The
    # 1e-2 tolerance covers bf16 re-rounding of intermediates across the two
    # different schedules; any structural bug would be O(0.1)-O(1) off.
    out_ref, attw_ref = attention_reference(query, context, w_in, w_out,
                                            compute_dtype=jnp.bfloat16)

    assert out.shape == (B, Lq, Do) and attw.shape == (B, Lq, Lk)
    assert jnp.allclose(out, out_ref, atol=1e-2, rtol=1e-2), \
        float(jnp.max(jnp.abs(out - out_ref)))
    assert jnp.allclose(attw, attw_ref, atol=1e-2, rtol=1e-2), \
        float(jnp.max(jnp.abs(attw - attw_ref)))
    # softmax sanity: attention weights of each query row sum to 1
    assert jnp.allclose(jnp.sum(attw.astype(jnp.float32), axis=-1), 1.0, atol=1e-3)

    print("KERNEL_OK")
</pallas_src>

<mosaic_0001>
module attributes {stable_mosaic.version = 11 : i64} {
  func.func @_attention_kernel(%arg0: i32, %arg1: i32, %arg2: memref<1x8x32xbf16, #tpu.memory_space<vmem>>, %arg3: memref<1x8x32xbf16, #tpu.memory_space<vmem>>, %arg4: memref<32x32xbf16, #tpu.memory_space<vmem>>, %arg5: memref<64x32xbf16, #tpu.memory_space<vmem>>, %arg6: memref<1x8x32xf32, #tpu.memory_space<vmem>>, %arg7: memref<1x8x8xf32, #tpu.memory_space<vmem>>) attributes {dimension_semantics = [#tpu.dimension_semantics<parallel>, #tpu.dimension_semantics<parallel>], iteration_bounds = array<i64: 2, 1>, scalar_prefetch = 0 : i64, scratch_operands = 0 : i64, tpu.core_type = #tpu.core_type<tc>, window_params = [{transform_indices = @transform_0, window_bounds = array<i64: 1, 8, 32>}, {transform_indices = @transform_1, window_bounds = array<i64: 1, 8, 32>}, {pipeline_mode = #tpu.pipeline_mode<synchronous>, transform_indices = @transform_2, window_bounds = array<i64: 32, 32>}, {pipeline_mode = #tpu.pipeline_mode<synchronous>, transform_indices = @transform_3, window_bounds = array<i64: 64, 32>}, {transform_indices = @transform_4, window_bounds = array<i64: 1, 8, 32>}, {transform_indices = @transform_5, window_bounds = array<i64: 1, 8, 8>}]} {
    %c0 = arith.constant 0 : index
    %c0_0 = arith.constant 0 : index
    %c0_1 = arith.constant 0 : index
    %0 = vector.load %arg2[%c0, %c0_0, %c0_1] : memref<1x8x32xbf16, #tpu.memory_space<vmem>>, vector<1x8x32xbf16>
    %c0_2 = arith.constant 0 : index
    %c0_3 = arith.constant 0 : index
    %c0_4 = arith.constant 0 : index
    %1 = vector.load %arg3[%c0_2, %c0_3, %c0_4] : memref<1x8x32xbf16, #tpu.memory_space<vmem>>, vector<1x8x32xbf16>
    %2 = vector.shape_cast %0 : vector<1x8x32xbf16> to vector<8x32xbf16>
    %c0_5 = arith.constant 0 : index
    %c0_6 = arith.constant 0 : index
    %3 = vector.load %arg4[%c0_5, %c0_6] : memref<32x32xbf16, #tpu.memory_space<vmem>>, vector<32x32xbf16>
    %cst = arith.constant dense<0.000000e+00> : vector<8x32xf32>
    %4 = tpu.matmul %2, %3, %cst {dimension_numbers = #tpu.dot_dimension_numbers<[1], [0], [0], [1], [0, 0, 1, 1], [], []>} : vector<8x32xbf16>, vector<32x32xbf16>, vector<8x32xf32> -> vector<8x32xf32>
    %5 = vector.shape_cast %4 : vector<8x32xf32> to vector<1x8x32xf32>
    %6 = arith.truncf %5 : vector<1x8x32xf32> to vector<1x8x32xbf16>
    %cst_7 = arith.constant dense<0.000000e+00> : vector<1x8x8xf32>
    %7 = tpu.matmul %6, %1, %cst_7 {dimension_numbers = #tpu.dot_dimension_numbers<[2], [2], [1], [1], [0, 0, 0, 1, 1, 1], [0], [0]>} : vector<1x8x32xbf16>, vector<1x8x32xbf16>, vector<1x8x8xf32> -> vector<1x8x8xf32>
    %cst_8 = arith.constant dense<0xFF800000> : vector<1x8xf32>
    %8 = vector.multi_reduction <maximumf>, %7, %cst_8 [2] : vector<1x8x8xf32> to vector<1x8xf32>
    %9 = vector.shape_cast %8 : vector<1x8xf32> to vector<1x8x1xf32>
    %10 = vector.broadcast %9 : vector<1x8x1xf32> to vector<1x8x8xf32>
    %11 = arith.subf %7, %10 : vector<1x8x8xf32>
    %12 = math.exp %11 : vector<1x8x8xf32>
    %cst_9 = arith.constant dense<0.000000e+00> : vector<1x8xf32>
    %13 = vector.multi_reduction <add>, %12, %cst_9 [2] : vector<1x8x8xf32> to vector<1x8xf32>
    %14 = vector.shape_cast %13 : vector<1x8xf32> to vector<1x8x1xf32>
    %15 = vector.broadcast %14 : vector<1x8x1xf32> to vector<1x8x8xf32>
    %16 = arith.divf %12, %15 : vector<1x8x8xf32>
    %17 = arith.truncf %16 : vector<1x8x8xf32> to vector<1x8x8xbf16>
    %cst_10 = arith.constant dense<0.000000e+00> : vector<1x8x32xf32>
    %18 = tpu.matmul %17, %1, %cst_10 {dimension_numbers = #tpu.dot_dimension_numbers<[2], [1], [1], [2], [0, 0, 0, 1, 1, 2], [0], [0]>} : vector<1x8x8xbf16>, vector<1x8x32xbf16>, vector<1x8x32xf32> -> vector<1x8x32xf32>
    %19 = vector.shape_cast %18 : vector<1x8x32xf32> to vector<8x32xf32>
    %20 = arith.truncf %19 : vector<8x32xf32> to vector<8x32xbf16>
    %c0_11 = arith.constant 0 : index
    %c0_12 = arith.constant 0 : index
    %21 = vector.load %arg5[%c0_11, %c0_12] : memref<64x32xbf16, #tpu.memory_space<vmem>>, vector<32x32xbf16>
    %cst_13 = arith.constant dense<0.000000e+00> : vector<8x32xf32>
    %22 = tpu.matmul %20, %21, %cst_13 {dimension_numbers = #tpu.dot_dimension_numbers<[1], [0], [0], [1], [0, 0, 1, 1], [], []>} : vector<8x32xbf16>, vector<32x32xbf16>, vector<8x32xf32> -> vector<8x32xf32>
    %23 = arith.truncf %4 : vector<8x32xf32> to vector<8x32xbf16>
    %c32 = arith.constant 32 : index
    %c0_14 = arith.constant 0 : index
    %24 = vector.load %arg5[%c32, %c0_14] : memref<64x32xbf16, #tpu.memory_space<vmem>>, vector<32x32xbf16>
    %cst_15 = arith.constant dense<0.000000e+00> : vector<8x32xf32>
    %25 = tpu.matmul %23, %24, %cst_15 {dimension_numbers = #tpu.dot_dimension_numbers<[1], [0], [0], [1], [0, 0, 1, 1], [], []>} : vector<8x32xbf16>, vector<32x32xbf16>, vector<8x32xf32> -> vector<8x32xf32>
    %26 = arith.addf %22, %25 : vector<8x32xf32>
    %27 = math.tanh %26 : vector<8x32xf32>
    %28 = vector.shape_cast %27 : vector<8x32xf32> to vector<1x8x32xf32>
    %c0_16 = arith.constant 0 : index
    %c0_17 = arith.constant 0 : index
    %c0_18 = arith.constant 0 : index
    %29 = vector.load %arg6[%c0_16, %c0_17, %c0_18] : memref<1x8x32xf32, #tpu.memory_space<vmem>>, vector<1x8x32xf32>
    tpu.vector_store %arg6[%c0_16, %c0_17, %c0_18], %28 {strides = array<i32>} : memref<1x8x32xf32, #tpu.memory_space<vmem>>, vector<1x8x32xf32>,
    %c0_19 = arith.constant 0 : index
    %c0_20 = arith.constant 0 : index
    %c0_21 = arith.constant 0 : index
    %30 = vector.load %arg7[%c0_19, %c0_20, %c0_21] : memref<1x8x8xf32, #tpu.memory_space<vmem>>, vector<1x8x8xf32>
    tpu.vector_store %arg7[%c0_19, %c0_20, %c0_21], %16 {strides = array<i32>} : memref<1x8x8xf32, #tpu.memory_space<vmem>>, vector<1x8x8xf32>,
    return
  }
  func.func @transform_0(%arg0: i32, %arg1: i32) -> (i32, i32, i32) {
    %c0_i32 = arith.constant 0 : i32
    %c0_i32_0 = arith.constant 0 : i32
    return %arg0, %arg1, %c0_i32 : i32, i32, i32
  }
  func.func @transform_1(%arg0: i32, %arg1: i32) -> (i32, i32, i32) {
    %c0_i32 = arith.constant 0 : i32
    %c0_i32_0 = arith.constant 0 : i32
    %c0_i32_1 = arith.constant 0 : i32
    return %arg0, %c0_i32, %c0_i32_0 : i32, i32, i32
  }
  func.func @transform_2(%arg0: i32, %arg1: i32) -> (i32, i32) {
    %c0_i32 = arith.constant 0 : i32
    %c0_i32_0 = arith.constant 0 : i32
    %c0_i32_1 = arith.constant 0 : i32
    return %c0_i32, %c0_i32_0 : i32, i32
  }
  func.func @transform_3(%arg0: i32, %arg1: i32) -> (i32, i32) {
    %c0_i32 = arith.constant 0 : i32
    %c0_i32_0 = arith.constant 0 : i32
    %c0_i32_1 = arith.constant 0 : i32
    return %c0_i32, %c0_i32_0 : i32, i32
  }
  func.func @transform_4(%arg0: i32, %arg1: i32) -> (i32, i32, i32) {
    %c0_i32 = arith.constant 0 : i32
    %c0_i32_0 = arith.constant 0 : i32
    return %arg0, %arg1, %c0_i32 : i32, i32, i32
  }
  func.func @transform_5(%arg0: i32, %arg1: i32) -> (i32, i32, i32) {
    %c0_i32 = arith.constant 0 : i32
    %c0_i32_0 = arith.constant 0 : i32
    return %arg0, %arg1, %c0_i32 : i32, i32, i32
  }
}

</mosaic_0001>

<llo_original>
// kernel: attention_pallas.1
$region0: #{attention_pallas.1}
  #allocation0 [shape = 'u32[]', space=smem, size = 0x4, offset = 0x4, fixed_abs, tag = 'smem constant byte address 0x4 - core index']
  #allocation1 [shape = 'u32[144,128]{1,0:T(1,128)}', space=vmem, size = 0x12000, scoped, tag = 'internal scratch']
  %s0 = inlined_call_operand.vmem [shape: bf16[2,8,32], index: 0, kind: input, shape index: {}]
  %s1 = inlined_call_operand.vmem [shape: bf16[2,8,32], index: 1, kind: input, shape index: {}]
  %s2 = inlined_call_operand.vmem [shape: bf16[32,32], index: 2, kind: input, shape index: {}]
  %s3 = inlined_call_operand.vmem [shape: bf16[64,32], index: 3, kind: input, shape index: {}]
  %s4 = inlined_call_operand.hbm [shape: f32[2,8,32], index: 4, kind: output, shape index: {0}]
  %s5 = inlined_call_operand.hbm [shape: f32[2,8,8], index: 5, kind: output, shape index: {1}]
  %6 = xla_tuple %s4, %s5
  %s7 = sld [smem:[#allocation0]]
  $region57: #{attention_pallas.1} parent=0
    _
  %s9 = ssub.s32 1, %s7
  %s10 = scalar_select 0, %s9, %s7
  $region1: #{attention_pallas.1} parent=0
    #allocation2 [shape = 'u8[8192]{0}', space=vmem, size = 0x2000, scoped, tag = 'output window, operand 0']
    #allocation3 [shape = 's32[2]{0}', space=sflag, size = 0x8, scoped, tag = 'scoped memory for attention_pallas.1']
    #allocation4 [shape = 'u8[8192]{0}', space=vmem, size = 0x2000, scoped, tag = 'output window, operand 1']
    #allocation5 [shape = 's32[2]{0}', space=sflag, size = 0x8, scoped, tag = 'scoped memory for attention_pallas.1']
    %11 = vsyncpa [#allocation3], 0
    %s12 = scalar_lea.sflag [#allocation3], 1
    %13 = vsyncpa %s12, 0
    %14 = vsyncpa [#allocation5], 0
    %s15 = scalar_lea.sflag [#allocation5], 1
    %16 = vsyncpa %s15, 0
    loop: start=0, step=1, limit=4
    $region2: #{attention_pallas.1} parent=1 // loop_pre_header
      _
    $region3: #{attention_pallas.1} parent=1 // loop_header
      %s18 = sphi 0, %s22
      %p19 = scmp.ge.s32.totalorder %s18, 4
      %s25 = sphi 0, %s37
      %s26 = sphi 0, %s33
      %s27 = sphi 0, %s25
      %s28 = sphi 0, %s26
      %s29 = sphi 0, %s27
      %s30 = sphi 0, %s28
      %s42 = sphi 0, %s44
      %s45 = sphi 0, %s42
      %s46 = sphi 0, %s45
      %s62 = sphi 0, %s46
      %s68 = sphi 0, %s70
      %s71 = sphi 0, %s68
      %s72 = sphi 0, %s71
      %s88 = sphi 0, %s72
      %s92 = sphi 0, %s92
      %s94 = sphi 0, %s92
      %s95 = sphi 0, %s94
      %s109 = sphi 0, %s95
      %s113 = sphi 0, %s113
      %s115 = sphi 0, %s113
      %s116 = sphi 0, %s115
      %s130 = sphi 0, %s116
      %s138 = sphi 0, %s140
      %s141 = sphi 0, %s138
      %s142 = sphi 0, %s141
      %s158 = sphi 0, %s142
      %s166 = sphi 0, %s168
      %s169 = sphi 0, %s166
      %s170 = sphi 0, %s169
      %s186 = sphi 0, %s170
    $region4: #{attention_pallas.1} parent=1 // loop_header_branch
      %21 = sbr.rel (%p19) target = $region8
    $region5: #{attention_pallas.1} parent=1 // loop_body
      %s23 = ssub.s32 %s18, 1
      %s24 = ssub.s32 %s18, 2
      %s31 = sadd.s32 1, %s26
      %p32 = scmp.ge.s32.totalorder %s31, 1
      %s33 = scalar_select %p32, 0, %s31
      %s34 = sadd.s32 1, %s25
      %s35 = scalar_select %p32, %s34, %s25
      %p36 = scmp.ge.s32.totalorder %s35, 2
      %s37 = scalar_select %p36, 0, %s35
      %s38 = ssub.s32 %s25, %s37
      %s39 = ssub.s32 %s26, %s33
      %s40 = sor.u32 %s38, %s39
      %p41 = scmp.eq.s32.totalorder %s40, 0
      %s43 = sadd.s32 %s42, 1
      %s44 = scalar_select %p41, %s42, %s43
      %p47 = pneg %p41
      %p48 = scmp.eq.s32.totalorder %s18, 1
      %p49 = por %p47, %p48
      %p50 = scmp.ne.s32.totalorder %s42, %s45
      %p51 = scmp.eq.s32.totalorder %s18, 0
      %p52 = por %p50, %p51
      %p53 = scmp.ne.s32.totalorder %s42, %s45
      %p54 = scmp.eq.s32.totalorder %s23, 1
      %p55 = por %p53, %p54
      %p56 = scmp.ne.s32.totalorder %s45, %s46
      %p57 = scmp.eq.s32.totalorder %s23, 0
      %p58 = por %p56, %p57
      %p59 = scmp.ne.s32.totalorder %s45, %s46
      %p60 = scmp.eq.s32.totalorder %s24, 1
      %p61 = por %p59, %p60
      %p63 = scmp.ne.s32.totalorder %s46, %s62
      %p64 = scmp.eq.s32.totalorder %s24, 0
      %p65 = por %p63, %p64
      %s66 = ssub.s32 %s25, %s37
      %p67 = scmp.eq.s32.totalorder %s66, 0
      %s69 = sadd.s32 %s68, 1
      %s70 = scalar_select %p67, %s68, %s69
      %p73 = pneg %p67
      %p74 = scmp.eq.s32.totalorder %s18, 1
      %p75 = por %p73, %p74
      %p76 = scmp.ne.s32.totalorder %s68, %s71
      %p77 = scmp.eq.s32.totalorder %s18, 0
      %p78 = por %p76, %p77
      %p79 = scmp.ne.s32.totalorder %s68, %s71
      %p80 = scmp.eq.s32.totalorder %s23, 1
      %p81 = por %p79, %p80
      %p82 = scmp.ne.s32.totalorder %s71, %s72
      %p83 = scmp.eq.s32.totalorder %s23, 0
      %p84 = por %p82, %p83
      %p85 = scmp.ne.s32.totalorder %s71, %s72
      %p86 = scmp.eq.s32.totalorder %s24, 1
      %p87 = por %p85, %p86
      %p89 = scmp.ne.s32.totalorder %s72, %s88
      %p90 = scmp.eq.s32.totalorder %s24, 0
      %p91 = por %p89, %p90
      %s93 = sadd.s32 %s92, 1
      %p96 = scmp.eq.s32.totalorder %s18, 1
      %p97 = scmp.ne.s32.totalorder %s92, %s94
      %p98 = scmp.eq.s32.totalorder %s18, 0
      %p99 = por %p97, %p98
      %p100 = scmp.ne.s32.totalorder %s92, %s94
      %p101 = scmp.eq.s32.totalorder %s23, 1
      %p102 = por %p100, %p101
      %p103 = scmp.ne.s32.totalorder %s94, %s95
      %p104 = scmp.eq.s32.totalorder %s23, 0
      %p105 = por %p103, %p104
      %p106 = scmp.ne.s32.totalorder %s94, %s95
      %p107 = scmp.eq.s32.totalorder %s24, 1
      %p108 = por %p106, %p107
      %p110 = scmp.ne.s32.totalorder %s95, %s109
      %p111 = scmp.eq.s32.totalorder %s24, 0
      %p112 = por %p110, %p111
      %s114 = sadd.s32 %s113, 1
      %p117 = scmp.eq.s32.totalorder %s18, 1
      %p118 = scmp.ne.s32.totalorder %s113, %s115
      %p119 = scmp.eq.s32.totalorder %s18, 0
      %p120 = por %p118, %p119
      %p121 = scmp.ne.s32.totalorder %s113, %s115
      %p122 = scmp.eq.s32.totalorder %s23, 1
      %p123 = por %p121, %p122
      %p124 = scmp.ne.s32.totalorder %s115, %s116
      %p125 = scmp.eq.s32.totalorder %s23, 0
      %p126 = por %p124, %p125
      %p127 = scmp.ne.s32.totalorder %s115, %s116
      %p128 = scmp.eq.s32.totalorder %s24, 1
      %p129 = por %p127, %p128
      %p131 = scmp.ne.s32.totalorder %s116, %s130
      %p132 = scmp.eq.s32.totalorder %s24, 0
      %p133 = por %p131, %p132
      %s134 = ssub.s32 %s25, %s37
      %s135 = ssub.s32 %s26, %s33
      %s136 = sor.u32 %s134, %s135
      %p137 = scmp.eq.s32.totalorder %s136, 0
      %s139 = sadd.s32 %s138, 1
      %s140 = scalar_select %p137, %s138, %s139
      %p143 = pneg %p137
      %p144 = scmp.eq.s32.totalorder %s18, 1
      %p145 = por %p143, %p144
      %p146 = scmp.ne.s32.totalorder %s138, %s141
      %p147 = scmp.eq.s32.totalorder %s18, 0
      %p148 = por %p146, %p147
      %p149 = scmp.ne.s32.totalorder %s138, %s141
      %p150 = scmp.eq.s32.totalorder %s23, 1
      %p151 = por %p149, %p150
      %p152 = scmp.ne.s32.totalorder %s141, %s142
      %p153 = scmp.eq.s32.totalorder %s23, 0
      %p154 = por %p152, %p153
      %p155 = scmp.ne.s32.totalorder %s141, %s142
      %p156 = scmp.eq.s32.totalorder %s24, 1
      %p157 = por %p155, %p156
      %p159 = scmp.ne.s32.totalorder %s142, %s158
      %p160 = scmp.eq.s32.totalorder %s24, 0
      %p161 = por %p159, %p160
      %s162 = ssub.s32 %s25, %s37
      %s163 = ssub.s32 %s26, %s33
      %s164 = sor.u32 %s162, %s163
      %p165 = scmp.eq.s32.totalorder %s164, 0
      %s167 = sadd.s32 %s166, 1
      %s168 = scalar_select %p165, %s166, %s167
      %p171 = pneg %p165
      %p172 = scmp.eq.s32.totalorder %s18, 1
      %p173 = por %p171, %p172
      %p174 = scmp.ne.s32.totalorder %s166, %s169
      %p175 = scmp.eq.s32.totalorder %s18, 0
      %p176 = por %p174, %p175
      %p177 = scmp.ne.s32.totalorder %s166, %s169
      %p178 = scmp.eq.s32.totalorder %s23, 1
      %p179 = por %p177, %p178
      %p180 = scmp.ne.s32.totalorder %s169, %s170
      %p181 = scmp.eq.s32.totalorder %s23, 0
      %p182 = por %p180, %p181
      %p183 = scmp.ne.s32.totalorder %s169, %s170
      %p184 = scmp.eq.s32.totalorder %s24, 1
      %p185 = por %p183, %p184
      %p187 = scmp.ne.s32.totalorder %s170, %s186
      %p188 = scmp.eq.s32.totalorder %s24, 0
      %p189 = por %p187, %p188
      %p190 = scmp.le.s32.totalorder 1, %s18
      %p191 = scmp.lt.s32.totalorder %s18, 3
      %p192 = pnand %p190, %p191
      %p193 = pneg %p192
      // Predicated region
      $region9: #{attention_pallas.1} parent=5 // pred_check
        _
      $region10: #{attention_pallas.1} parent=5 // pred_check_branch
        %195 = sbr.rel (%p192) target = $region12
      $region11: #{attention_pallas.1} parent=5 // pred_region
        %s196 = ssub.s32 %s18, 1
        // Predicated region
        $region13: #{attention_pallas.1} parent=11 // pred_check
          %p197 = pneg %p105
        $region14: #{attention_pallas.1} parent=11 // pred_check_branch
          %199 = sbr.rel (%p197) target = $region16
        $region15: #{attention_pallas.1} parent=11 // pred_region
          _
        $region16: #{attention_pallas.1} parent=11 // pred_fallthru
          _
        // Predicated region
        $region17: #{attention_pallas.1} parent=11 // pred_check
          %p200 = pneg %p126
        $region18: #{attention_pallas.1} parent=11 // pred_check_branch
          %202 = sbr.rel (%p200) target = $region20
        $region19: #{attention_pallas.1} parent=11 // pred_region
          _
        $region20: #{attention_pallas.1} parent=11 // pred_fallthru
          _
      $region12: #{attention_pallas.1} parent=5 // pred_fallthru
        _
      %p203 = scmp.lt.s32.totalorder %s18, 2
      // Predicated region
      $region21: #{attention_pallas.1} parent=5 // pred_check
        %p204 = pneg %p203
      $region22: #{attention_pallas.1} parent=5 // pred_check_branch
        %206 = sbr.rel (%p204) target = $region24
      $region23: #{attention_pallas.1} parent=5 // pred_region
        // Predicated region
        $region25: #{attention_pallas.1} parent=23 // pred_check
          %p207 = pneg %p52
        $region26: #{attention_pallas.1} parent=23 // pred_check_branch
          %209 = sbr.rel (%p207) target = $region28
        $region27: #{attention_pallas.1} parent=23 // pred_region
          %p210 = scmp.lt.s32.totalorder %s25, 1
          %s211 = scalar_select %p210, %s25, 1
          %p212 = scmp.lt.s32.totalorder %s26, 0
          %s213 = scalar_select %p212, %s26, 0
          %s214 = sadd.s32 %s213, %s211
          %s215 = smul.addr %s214, 4
          %s216 = scalar_lea.vmem %s0, %s215
        $region28: #{attention_pallas.1} parent=23 // pred_fallthru
          _
        // Predicated region
        $region29: #{attention_pallas.1} parent=23 // pred_check
          %p217 = pneg %p78
        $region30: #{attention_pallas.1} parent=23 // pred_check_branch
          %219 = sbr.rel (%p217) target = $region32
        $region31: #{attention_pallas.1} parent=23 // pred_region
          %p220 = scmp.lt.s32.totalorder %s25, 1
          %s221 = scalar_select %p220, %s25, 1
          %s222 = smul.addr %s221, 4
          %s223 = scalar_lea.vmem %s1, %s222
        $region32: #{attention_pallas.1} parent=23 // pred_fallthru
          _
      $region24: #{attention_pallas.1} parent=5 // pred_fallthru
        _
      %p224 = scmp.le.s32.totalorder 1, %s18
      %p225 = scmp.lt.s32.totalorder %s18, 3
      %p226 = pnand %p224, %p225
      %p227 = pneg %p226
      // Predicated region
      $region33: #{attention_pallas.1} parent=5 // pred_check
        _
      $region34: #{attention_pallas.1} parent=5 // pred_check_branch
        %229 = sbr.rel (%p226) target = $region36
      $region35: #{attention_pallas.1} parent=5 // pred_region
        %s230 = ssub.s32 %s18, 1
        %p231 = scmp.lt.s32.totalorder %s27, 1
        %s232 = scalar_select %p231, %s27, 1
        %p233 = scmp.lt.s32.totalorder %s28, 0
        %s234 = scalar_select %p233, %s28, 0
        %s235 = sadd.s32 %s234, %s232
        %s236 = smul.addr %s235, 4
        %s237 = scalar_lea.vmem %s0, %s236
        %p238 = pneg %p58
        %p239 = pneg %p55
        %p240 = scmp.lt.s32.totalorder %s27, 1
        %s241 = scalar_select %p240, %s27, 1
        %s242 = smul.addr %s241, 4
        %s243 = scalar_lea.vmem %s1, %s242
        %p244 = pneg %p84
        %p245 = pneg %p81
        %p246 = pneg %p105
        %p247 = pneg %p102
        %p248 = pneg %p126
        %p249 = pneg %p123
        %p250 = pneg %p154
        %p251 = pneg %p151
        %s252 = sand.u32 %s141, 1
        %s253 = scalar_lea.sflag [#allocation3], %s252
        %s254 = sand.u32 %s141, 1
        %s255 = smul.addr %s254, 8
        %s256 = scalar_lea.vmem [#allocation2], %s255
        %p257 = pneg %p182
        %p258 = pneg %p179
        %s259 = sand.u32 %s169, 1
        %s260 = scalar_lea.sflag [#allocation5], %s259
        %s261 = sand.u32 %s169, 1
        %s262 = smul.addr %s261, 8
        %s263 = scalar_lea.vmem [#allocation4], %s262
        %p264 = scmp.lt.s32.totalorder %s27, 1
        %s265 = scalar_select %p264, %s27, 1
        %p266 = scmp.lt.s32.totalorder %s28, 0
        %s267 = scalar_select %p266, %s28, 0
        %s268 = sadd.s32 %s267, %s265
        %s269 = smul.addr %s268, 4
        %s270 = scalar_lea.vmem %s0, %s269
        %p271 = scmp.lt.s32.totalorder %s27, 1
        %s272 = scalar_select %p271, %s27, 1
        %s273 = smul.addr %s272, 4
        %s274 = scalar_lea.vmem %s1, %s273
        %v276 = vld [vmem:[%s270] sm:$0xf]
        %v277 = vld [vmem:[%s274] sm:$0xf]
        %v278 = vld [vmem:[%s2] sm:$0xf]
        %v279 = vld [vmem:[%s2 + $0x4] sm:$0xf]
        %v280 = vld [vmem:[%s2 + $0x8] sm:$0xf]
        %v281 = vld [vmem:[%s2 + $0xc] sm:$0xf]
        %v286 = vunpack.c.l.b16 %v278
        %v287 = vunpack.c.l.b16 %v279
        %v288 = vunpack.c.l.b16 %v280
        %v289 = vunpack.c.l.b16 %v281
        %v290 = vpack.c.b16 %v287, %v286
        %v291 = vpack.c.b16 %v289, %v288
        %vm294 = vcmask 261120
        %v296 = vsel %vm294, %v276, 0
        %298 = vmatprep.subr.bf16.mxu0 0
        %299 = vmatpush1.bf16.msra.mxu0 0
        %300 = vmatprep.subr.bf16.mxu0 0
        %301 = vmatpush1.bf16.msra.mxu0 0
        %302 = vmatprep.subr.bf16.mxu0 0
        %303 = vmatpush1.bf16.msra.mxu0 0
        %304 = vmatprep.subr.bf16.mxu0 0
        %305 = vmatpush1.bf16.msra.mxu0 0
        %306 = vmatprep.subr.bf16.mxu0 0
        %307 = vmatpush1.bf16.msra.mxu0 0
        %308 = vmatprep.subr.bf16.mxu0 0
        %309 = vmatpush1.bf16.msra.mxu0 0
        %310 = vmatprep.subr.bf16.mxu0 0
        %311 = vmatpush1.bf16.msra.mxu0 %v291
        %312 = vmatprep.subr.bf16.mxu0 0
        %313 = vmatpush1.bf16.msra.mxu0 %v290
        %314 = vmatprep.subr.bf16.mxu0 0
        %315 = vmatpush2.bf16.msra.mxu0 0
        %316 = vmatprep.subr.bf16.mxu0 0
        %317 = vmatpush2.bf16.msra.mxu0 0
        %318 = vmatprep.subr.bf16.mxu0 0
        %319 = vmatpush2.bf16.msra.mxu0 0
        %320 = vmatprep.subr.bf16.mxu0 0
        %321 = vmatpush2.bf16.msra.mxu0 0
        %322 = vmatprep.subr.bf16.mxu0 0
        %323 = vmatpush2.bf16.msra.mxu0 0
        %324 = vmatprep.subr.bf16.mxu0 0
        %325 = vmatpush2.bf16.msra.mxu0 0
        %326 = vmatprep.subr.bf16.mxu0 0
        %327 = vmatpush2.bf16.msra.mxu0 0
        %328 = vmatprep.subr.bf16.mxu0 0
        %329 = vmatpush2.bf16.msra.mxu0 0
        %330 = vmatprep.mubr.bf16.mxu0 0
        %331 = vmatmul.mubr.bf16.gmra.mxu0 %v296
        %v332 = vpop.f32.mrf.mxu0
        %v333 = vadd.f32 0.0, %v332
        %v334 = vpop.f32.mrf.mxu0
        %v335 = vpop.f32.mrf.mxu0
        %v336 = vpop.f32.mrf.mxu0
        %337 = vdwg.mxu0
        %v338 = vpack.c.bf16 %v333, %v333
        %v340 = vsel %vm294, %v338, 0
        %v343 = vsel %vm294, %v277, 0
        %345 = vmatprep.subr.bf16.mxu0 0
        %346 = vmatpush1.bf16.xpose.msra.mxu0 0
        %347 = vmatprep.subr.bf16.mxu0 0
        %348 = vmatpush1.bf16.xpose.msra.mxu0 0
        %349 = vmatprep.subr.bf16.mxu0 0
        %350 = vmatpush1.bf16.xpose.msra.mxu0 0
        %351 = vmatprep.subr.bf16.mxu0 0
        %352 = vmatpush1.bf16.xpose.msra.mxu0 0
        %353 = vmatprep.subr.bf16.mxu0 0
        %354 = vmatpush1.bf16.xpose.msra.mxu0 0
        %355 = vmatprep.subr.bf16.mxu0 0
        %356 = vmatpush1.bf16.xpose.msra.mxu0 0
        %357 = vmatprep.subr.bf16.mxu0 0
        %358 = vmatpush1.bf16.xpose.msra.mxu0 0
        %359 = vmatprep.subr.bf16.mxu0 0
        %360 = vmatpush1.bf16.xpose.msra.mxu0 %v343
        %361 = vmatprep.subr.bf16.mxu0 0
        %362 = vmatpush2.bf16.xpose.msra.mxu0 0
        %363 = vmatprep.subr.bf16.mxu0 0
        %364 = vmatpush2.bf16.xpose.msra.mxu0 0
        %365 = vmatprep.subr.bf16.mxu0 0
        %366 = vmatpush2.bf16.xpose.msra.mxu0 0
        %367 = vmatprep.subr.bf16.mxu0 0
        %368 = vmatpush2.bf16.xpose.msra.mxu0 0
        %369 = vmatprep.subr.bf16.mxu0 0
        %370 = vmatpush2.bf16.xpose.msra.mxu0 0
        %371 = vmatprep.subr.bf16.mxu0 0
        %372 = vmatpush2.bf16.xpose.msra.mxu0 0
        %373 = vmatprep.subr.bf16.mxu0 0
        %374 = vmatpush2.bf16.xpose.msra.mxu0 0
        %375 = vmatprep.subr.bf16.mxu0 0
        %376 = vmatpush2.bf16.xpose.msra.mxu0 0
        %377 = vmatprep.mubr.bf16.mxu0 0
        %378 = vmatmul.mubr.bf16.gmra.mxu0 %v340
        %v379 = vpop.f32.mrf.mxu0
        %v380 = vadd.f32 0.0, %v379
        %v381 = vpop.f32.mrf.mxu0
        %v382 = vpop.f32.mrf.mxu0
        %v383 = vpop.f32.mrf.mxu0
        %384 = vdwg.mxu0
        %vm385 = vcmask 64512
        %v386 = vsel %vm385, %v380, -inf
        %387 = vmax.xlane.f32.xlu0 %v386
        %v388 = vpop.xlane.xlu0 %387
        %v389 = vsub.f32 %v380, %v388
        %v390 = vmul.f32 %v389, 1.442695
        %v391 = vpow.pop %v390
        %v392 = vsel %vm385, %v391, 0.0
        %393 = vadd.xlane.f32.xlu0 %v392
        %v394 = vpop.xlane.xlu0 %393
        %v395 = vrcp.pop %v394
        %v396 = vmul.f32 %v391, %v395
        %v397 = vpack.c.bf16 %v396, %v396
        %v399 = vsel %vm385, %v397, 0
        %vm401 = vcmask 1043456
        %v402 = vsel %vm401, %v277, 0
        %404 = vmatprep.subr.bf16.mxu0 0
        %405 = vmatpush1.bf16.msra.mxu0 0
        %406 = vmatprep.subr.bf16.mxu0 0
        %407 = vmatpush1.bf16.msra.mxu0 0
        %408 = vmatprep.subr.bf16.mxu0 0
        %409 = vmatpush1.bf16.msra.mxu0 0
        %410 = vmatprep.subr.bf16.mxu0 0
        %411 = vmatpush1.bf16.msra.mxu0 0
        %412 = vmatprep.subr.bf16.mxu0 0
        %413 = vmatpush1.bf16.msra.mxu0 0
        %414 = vmatprep.subr.bf16.mxu0 0
        %415 = vmatpush1.bf16.msra.mxu0 0
        %416 = vmatprep.subr.bf16.mxu0 0
        %417 = vmatpush1.bf16.msra.mxu0 0
        %418 = vmatprep.subr.bf16.mxu0 0
        %419 = vmatpush1.bf16.msra.mxu0 %v402
        %420 = vmatprep.subr.bf16.mxu0 0
        %421 = vmatpush2.bf16.msra.mxu0 0
        %422 = vmatprep.subr.bf16.mxu0 0
        %423 = vmatpush2.bf16.msra.mxu0 0
        %424 = vmatprep.subr.bf16.mxu0 0
        %425 = vmatpush2.bf16.msra.mxu0 0
        %426 = vmatprep.subr.bf16.mxu0 0
        %427 = vmatpush2.bf16.msra.mxu0 0
        %428 = vmatprep.subr.bf16.mxu0 0
        %429 = vmatpush2.bf16.msra.mxu0 0
        %430 = vmatprep.subr.bf16.mxu0 0
        %431 = vmatpush2.bf16.msra.mxu0 0
        %432 = vmatprep.subr.bf16.mxu0 0
        %433 = vmatpush2.bf16.msra.mxu0 0
        %434 = vmatprep.subr.bf16.mxu0 0
        %435 = vmatpush2.bf16.msra.mxu0 0
        %436 = vmatprep.mubr.bf16.mxu0 0
        %437 = vmatmul.mubr.bf16.gmra.mxu0 %v399
        %v438 = vpop.f32.mrf.mxu0
        %v439 = vadd.f32 0.0, %v438
        %v440 = vpop.f32.mrf.mxu0
        %v441 = vpop.f32.mrf.mxu0
        %v442 = vpop.f32.mrf.mxu0
        %443 = vdwg.mxu0
        %v444 = vpack.c.bf16 %v439, %v439
        %v445 = vld [vmem:[%s3] sm:$0xf]
        %v446 = vld [vmem:[%s3 + $0x4] sm:$0xf]
        %v447 = vld [vmem:[%s3 + $0x8] sm:$0xf]
        %v448 = vld [vmem:[%s3 + $0xc] sm:$0xf]
        %v449 = vld [vmem:[%s3 + $0x10] sm:$0xf]
        %v450 = vld [vmem:[%s3 + $0x14] sm:$0xf]
        %v451 = vld [vmem:[%s3 + $0x18] sm:$0xf]
        %v452 = vld [vmem:[%s3 + $0x1c] sm:$0xf]
        %v457 = vunpack.c.l.b16 %v449
        %v458 = vunpack.c.l.b16 %v450
        %v459 = vunpack.c.l.b16 %v451
        %v460 = vunpack.c.l.b16 %v452
        %v461 = vpack.c.b16 %v458, %v457
        %v462 = vpack.c.b16 %v460, %v459
        %465 = vmatprep.subr.bf16.mxu0 0
        %466 = vmatpush1.bf16.msra.mxu0 0
        %467 = vmatprep.subr.bf16.mxu0 0
        %468 = vmatpush1.bf16.msra.mxu0 0
        %469 = vmatprep.subr.bf16.mxu0 0
        %470 = vmatpush1.bf16.msra.mxu0 0
        %471 = vmatprep.subr.bf16.mxu0 0
        %472 = vmatpush1.bf16.msra.mxu0 0
        %473 = vmatprep.subr.bf16.mxu0 0
        %474 = vmatpush1.bf16.msra.mxu0 0
        %475 = vmatprep.subr.bf16.mxu0 0
        %476 = vmatpush1.bf16.msra.mxu0 0
        %477 = vmatprep.subr.bf16.mxu0 0
        %478 = vmatpush1.bf16.msra.mxu0 %v462
        %479 = vmatprep.subr.bf16.mxu0 0
        %480 = vmatpush1.bf16.msra.mxu0 %v461
        %481 = vmatprep.subr.bf16.mxu0 0
        %482 = vmatpush2.bf16.msra.mxu0 0
        %483 = vmatprep.subr.bf16.mxu0 0
        %484 = vmatpush2.bf16.msra.mxu0 0
        %485 = vmatprep.subr.bf16.mxu0 0
        %486 = vmatpush2.bf16.msra.mxu0 0
        %487 = vmatprep.subr.bf16.mxu0 0
        %488 = vmatpush2.bf16.msra.mxu0 0
        %489 = vmatprep.subr.bf16.mxu0 0
        %490 = vmatpush2.bf16.msra.mxu0 0
        %491 = vmatprep.subr.bf16.mxu0 0
        %492 = vmatpush2.bf16.msra.mxu0 0
        %493 = vmatprep.subr.bf16.mxu0 0
        %494 = vmatpush2.bf16.msra.mxu0 0
        %495 = vmatprep.subr.bf16.mxu0 0
        %496 = vmatpush2.bf16.msra.mxu0 0
        %497 = vmatprep.mubr.bf16.mxu0 0
        %498 = vmatmul.mubr.bf16.gmra.mxu0 %v340
        %v499 = vpop.f32.mrf.mxu0
        %v500 = vadd.f32 0.0, %v499
        %v501 = vpop.f32.mrf.mxu0
        %v502 = vpop.f32.mrf.mxu0
        %v503 = vpop.f32.mrf.mxu0
        %504 = vdwg.mxu0
        %v509 = vunpack.c.l.b16 %v445
        %v510 = vunpack.c.l.b16 %v446
        %v511 = vunpack.c.l.b16 %v447
        %v512 = vunpack.c.l.b16 %v448
        %v513 = vpack.c.b16 %v510, %v509
        %v514 = vpack.c.b16 %v512, %v511
        %v518 = vsel %vm294, %v444, 0
        %520 = vmatprep.subr.bf16.mxu0 0
        %521 = vmatpush1.bf16.msra.mxu0 0
        %522 = vmatprep.subr.bf16.mxu0 0
        %523 = vmatpush1.bf16.msra.mxu0 0
        %524 = vmatprep.subr.bf16.mxu0 0
        %525 = vmatpush1.bf16.msra.mxu0 0
        %526 = vmatprep.subr.bf16.mxu0 0
        %527 = vmatpush1.bf16.msra.mxu0 0
        %528 = vmatprep.subr.bf16.mxu0 0
        %529 = vmatpush1.bf16.msra.mxu0 0
        %530 = vmatprep.subr.bf16.mxu0 0
        %531 = vmatpush1.bf16.msra.mxu0 0
        %532 = vmatprep.subr.bf16.mxu0 0
        %533 = vmatpush1.bf16.msra.mxu0 %v514
        %534 = vmatprep.subr.bf16.mxu0 0
        %535 = vmatpush1.bf16.msra.mxu0 %v513
        %536 = vmatprep.subr.bf16.mxu0 0
        %537 = vmatpush2.bf16.msra.mxu0 0
        %538 = vmatprep.subr.bf16.mxu0 0
        %539 = vmatpush2.bf16.msra.mxu0 0
        %540 = vmatprep.subr.bf16.mxu0 0
        %541 = vmatpush2.bf16.msra.mxu0 0
        %542 = vmatprep.subr.bf16.mxu0 0
        %543 = vmatpush2.bf16.msra.mxu0 0
        %544 = vmatprep.subr.bf16.mxu0 0
        %545 = vmatpush2.bf16.msra.mxu0 0
        %546 = vmatprep.subr.bf16.mxu0 0
        %547 = vmatpush2.bf16.msra.mxu0 0
        %548 = vmatprep.subr.bf16.mxu0 0
        %549 = vmatpush2.bf16.msra.mxu0 0
        %550 = vmatprep.subr.bf16.mxu0 0
        %551 = vmatpush2.bf16.msra.mxu0 0
        %552 = vmatprep.mubr.bf16.mxu0 0
        %553 = vmatmul.mubr.bf16.gmra.mxu0 %v518
        %v554 = vpop.f32.mrf.mxu0
        %v555 = vadd.f32 %v500, %v554
        %v556 = vpop.f32.mrf.mxu0
        %v557 = vpop.f32.mrf.mxu0
        %v558 = vpop.f32.mrf.mxu0
        %559 = vdwg.mxu0
        %v560 = vtanh.pop %v555
        %561 = vst.msk [vmem:[%s256] sm:$0xff] %vm294, %v560
        %562 = vst.msk [vmem:[%s263] sm:$0xff] %vm385, %v396
        %s563 = sand.u32 %s141, 1
        %s564 = scalar_lea.sflag [#allocation3], %s563
        %s565 = sand.u32 %s141, 1
        %s566 = smul.addr %s565, 8
        %s567 = scalar_lea.vmem [#allocation2], %s566
        %s568 = sand.u32 %s169, 1
        %s569 = scalar_lea.sflag [#allocation5], %s568
        %s570 = sand.u32 %s169, 1
        %s571 = smul.addr %s570, 8
        %s572 = scalar_lea.vmem [#allocation4], %s571
        // Predicated region
        $region37: #{attention_pallas.1} parent=35 // pred_check
          %p573 = pneg %p151
        $region38: #{attention_pallas.1} parent=35 // pred_check_branch
          %575 = sbr.rel (%p573) target = $region40
        $region39: #{attention_pallas.1} parent=35 // pred_region
          %s577 = ssub.s32 128, 128
          %578 = vsyncadd %s564, %s577
          %s579 = sadd.s32 %s28, %s27
          %s580 = smul.addr %s579, 128
          %s581 = scalar_lea.hbm %s4, %s580
          %s583 = sshll.u32 %s567, 4
          %s584 = int_to_ptr.vmem [resolvable:$true] %s583
          %586 = dma.vmem_to_hbm [thread:$0]  %s584, 128, %s581, %s564
        $region40: #{attention_pallas.1} parent=35 // pred_fallthru
          _
        // Predicated region
        $region41: #{attention_pallas.1} parent=35 // pred_check
          %p587 = pneg %p179
        $region42: #{attention_pallas.1} parent=35 // pred_check_branch
          %589 = sbr.rel (%p587) target = $region44
        $region43: #{attention_pallas.1} parent=35 // pred_region
          %s591 = ssub.s32 128, 128
          %592 = vsyncadd %s569, %s591
          %s593 = sadd.s32 %s28, %s27
          %s594 = smul.addr %s593, 128
          %s595 = scalar_lea.hbm %s5, %s594
          %s597 = sshll.u32 %s572, 4
          %s598 = int_to_ptr.vmem [resolvable:$true] %s597
          %600 = dma.vmem_to_hbm [thread:$0]  %s598, 128, %s595, %s569
        $region44: #{attention_pallas.1} parent=35 // pred_fallthru
          _
      $region36: #{attention_pallas.1} parent=5 // pred_fallthru
        _
      %p601 = scmp.le.s32.totalorder 2, %s18
      // Predicated region
      $region45: #{attention_pallas.1} parent=5 // pred_check
        %p602 = pneg %p601
      $region46: #{attention_pallas.1} parent=5 // pred_check_branch
        %604 = sbr.rel (%p602) target = $region48
      $region47: #{attention_pallas.1} parent=5 // pred_region
        %s605 = ssub.s32 %s18, 2
        // Predicated region
        $region49: #{attention_pallas.1} parent=47 // pred_check
          %p606 = pneg %p157
        $region50: #{attention_pallas.1} parent=47 // pred_check_branch
          %608 = sbr.rel (%p606) target = $region52
        $region51: #{attention_pallas.1} parent=47 // pred_region
          %s609 = sand.u32 %s142, 1
          %s610 = scalar_lea.sflag [#allocation3], %s609
          %s611 = sand.u32 %s142, 1
          %s612 = smul.addr %s611, 8
          %s613 = scalar_lea.vmem [#allocation2], %s612
          %614 = dma.done %s610, 128
        $region52: #{attention_pallas.1} parent=47 // pred_fallthru
          _
        // Predicated region
        $region53: #{attention_pallas.1} parent=47 // pred_check
          %p615 = pneg %p185
        $region54: #{attention_pallas.1} parent=47 // pred_check_branch
          %617 = sbr.rel (%p615) target = $region56
        $region55: #{attention_pallas.1} parent=47 // pred_region
          %s618 = sand.u32 %s170, 1
          %s619 = scalar_lea.sflag [#allocation5], %s618
          %s620 = sand.u32 %s170, 1
          %s621 = smul.addr %s620, 8
          %s622 = scalar_lea.vmem [#allocation4], %s621
          %623 = dma.done %s619, 128
        $region56: #{attention_pallas.1} parent=47 // pred_fallthru
          _
      $region48: #{attention_pallas.1} parent=5 // pred_fallthru
        _
    $region6: #{attention_pallas.1} parent=1 // loop_footer
      %s22 = sadd.s32 1, %s18
    $region7: #{attention_pallas.1} parent=1 // loop_footer_branch
      %17 = sbr.rel target = $region3
    $region8: #{attention_pallas.1} parent=1 // loop_exit
      _
    %624 = vsyncpa [#allocation3], 1
    %s625 = scalar_lea.sflag [#allocation3], 1
    %626 = vsyncpa %s625, 1
    %627 = vsyncpa [#allocation5], 1
    %s628 = scalar_lea.sflag [#allocation5], 1
    %629 = vsyncpa %s628, 1

</llo_original>
